<compile_context>
chip_gen: v5e
topology: v5e:2x2
jax: 0.10.0
libtpu: 0.0.40
codegen_flags: <defaults>
</compile_context>

<pallas_src>
import functools

import jax
import jax.numpy as jnp
from jax.experimental import pallas as pl
from jax.experimental.pallas import tpu as pltpu


def _downsample_kernel(x_ref, pw_ref, o_ref, *, stride, expand):
    # x_ref : (tc*Hin, Win)        cropped NCHW rows for this (batch, channel-block)
    # pw_ref: (Win, Wo)            0/1 W-pooling matrix (same block every step -> resident)
    # o_ref : (expand, tc*Ho, Wo)  slot 0 = pooled data, slots 1.. = zero channels
    n_rows = o_ref.shape[1]                      # tc * Ho

    # H-direction pooling: strided sublane taps, pairwise-tree accumulation in f32 (VPU).
    taps = [x_ref[pl.ds(t, n_rows, stride=stride), :].astype(jnp.float32)
            for t in range(stride)]
    while len(taps) > 1:
        nxt = [taps[i] + taps[i + 1] for i in range(0, len(taps) - 1, 2)]
        if len(taps) % 2:
            nxt.append(taps[-1])
        taps = nxt
    hsum = taps[0]                               # (tc*Ho, Win)

    # W-direction pooling on the MXU (idle otherwise), then scale by 1/(stride*stride).
    pooled = jnp.dot(hsum, pw_ref[...].astype(jnp.float32),
                     preferred_element_type=jnp.float32)
    o_ref[0] = (pooled * (1.0 / (stride * stride))).astype(o_ref.dtype)
    if expand > 1:
        # Zero channel expansion written directly in VMEM (no HBM zeros, no concat).
        o_ref[1:] = jnp.zeros((expand - 1,) + pooled.shape, o_ref.dtype)


def _pick_channel_tile(C, Ho, Hin, bytes_per_channel, target_bytes=4 << 20):
    """Largest divisor of C whose input block stays near target_bytes (8-aligned sublanes)."""
    if C * bytes_per_channel <= target_bytes:
        return C
    for d in range(C, 0, -1):
        if C % d:
            continue
        if d * bytes_per_channel <= target_bytes and (d * Ho) % 8 == 0 and (d * Hin) % 8 == 0:
            return d
    return C   # no aligned divisor fits: fall back to whole-C blocks


def downsample(x, n_out, stride):
    """Pallas equivalent of Downsample(nIn, nOut, stride).forward(x); x is NCHW."""
    B, C, H, W = x.shape
    assert n_out % C == 0, "nOut must be a multiple of nIn"
    expand = n_out // C
    Ho, Wo = H // stride, W // stride            # AvgPool2d default: floor, drop remainder
    Hin, Win = Ho * stride, Wo * stride

    # Free views only (no transpose, no extra HBM round trip): crop is a no-op when H, W
    # are multiples of stride; the reshape merges adjacent contiguous dims.
    xv = x[:, :, :Hin, :Win].reshape(B, C * Hin, Win)

    # Tiny 0/1 W-pooling matrix: pw[w, wo] = 1 iff w // stride == wo.
    rows = jax.lax.broadcasted_iota(jnp.int32, (Win, Wo), 0)
    cols = jax.lax.broadcasted_iota(jnp.int32, (Win, Wo), 1)
    pw = (rows // stride == cols).astype(x.dtype)

    itemsize = x.dtype.itemsize
    tc = _pick_channel_tile(C, Ho, Hin, Hin * Win * itemsize)
    in_blk = tc * Hin * Win * itemsize
    out_blk = expand * tc * Ho * Wo * itemsize
    pw_blk = Win * Wo * itemsize
    vmem_limit = int(min(64 << 20, max(32 << 20, 4 * (in_blk + out_blk + pw_blk))))

    kern = functools.partial(_downsample_kernel, stride=stride, expand=expand)
    out = pl.pallas_call(
        kern,
        out_shape=jax.ShapeDtypeStruct((B, expand, C * Ho, Wo), x.dtype),
        grid=(B, C // tc),
        in_specs=[
            # (batch squeezed, tc*Hin sublane rows, Win lanes)
            pl.BlockSpec((None, tc * Hin, Win), lambda b, cb: (b, cb, 0)),
            # W-pooling matrix: constant block index -> fetched once, stays resident
            pl.BlockSpec((Win, Wo), lambda b, cb: (0, 0)),
        ],
        out_specs=pl.BlockSpec((None, expand, tc * Ho, Wo), lambda b, cb: (b, 0, cb, 0)),
        compiler_params=pltpu.CompilerParams(
            dimension_semantics=("parallel", "parallel"),
            vmem_limit_bytes=vmem_limit,
        ),
    )(xv, pw)
    # (B, expand, C*Ho, Wo) -> (B, expand*C, Ho, Wo): contiguous split/merge, free view.
    return out.reshape(B, n_out, Ho, Wo)


def _downsample_ref(x, n_out, stride):
    """Pure-JAX reference mirroring the PyTorch module (for a correctness check)."""
    B, C, H, W = x.shape
    Ho, Wo = H // stride, W // stride
    y = x[:, :, :Ho * stride, :Wo * stride]
    y = y.reshape(B, C, Ho, stride, Wo, stride).mean(axis=(3, 5))
    return jnp.concatenate([y] + [jnp.zeros_like(y)] * (n_out // C - 1), axis=1)


if __name__ == "__main__":
    key = jax.random.PRNGKey(0)
    B, C, H, W = 2, 4, 16, 16
    stride, n_out = 2, 8                          # expand_ratio = nOut // nIn = 2
    x = jax.random.normal(key, (B, C, H, W), jnp.float32)   # NCHW, like the PyTorch module

    fn = jax.jit(functools.partial(downsample, n_out=n_out, stride=stride))
    out = jax.block_until_ready(fn(x))
    assert out.shape == (B, n_out, H // stride, W // stride) and out.dtype == jnp.float32

    ref = _downsample_ref(x, n_out, stride)
    assert bool(jnp.allclose(out, ref, atol=1e-5, rtol=1e-5)), "mismatch vs reference"
    print("KERNEL_OK")
</pallas_src>

<mosaic_0001>
module attributes {stable_mosaic.version = 11 : i64} {
  func.func @_downsample_kernel(%arg0: i32, %arg1: i32, %arg2: memref<1x64x16xf32, #tpu.memory_space<vmem>>, %arg3: memref<16x8xf32, #tpu.memory_space<vmem>>, %arg4: memref<1x2x32x8xf32, #tpu.memory_space<vmem>>) attributes {dimension_semantics = [#tpu.dimension_semantics<parallel>, #tpu.dimension_semantics<parallel>], iteration_bounds = array<i64: 2, 1>, scalar_prefetch = 0 : i64, scratch_operands = 0 : i64, tpu.core_type = #tpu.core_type<tc>, window_params = [{transform_indices = @transform_0, window_bounds = array<i64: 1, 64, 16>}, {pipeline_mode = #tpu.pipeline_mode<synchronous>, transform_indices = @transform_1, window_bounds = array<i64: 16, 8>}, {transform_indices = @transform_2, window_bounds = array<i64: 1, 2, 32, 8>}]} {
    %c0 = arith.constant 0 : index
    %c0_0 = arith.constant 0 : index
    %c0_1 = arith.constant 0 : index
    %0 = tpu.strided_load %arg2[%c0, %c0_0, %c0_1] {strides = array<i32: 1, 2, 1>} : memref<1x64x16xf32, #tpu.memory_space<vmem>>, vector<1x32x16xf32>
    %1 = vector.shape_cast %0 : vector<1x32x16xf32> to vector<32x16xf32>
    %c0_2 = arith.constant 0 : index
    %c1 = arith.constant 1 : index
    %c0_3 = arith.constant 0 : index
    %2 = tpu.strided_load %arg2[%c0_2, %c1, %c0_3] {strides = array<i32: 1, 2, 1>} : memref<1x64x16xf32, #tpu.memory_space<vmem>>, vector<1x32x16xf32>
    %3 = vector.shape_cast %2 : vector<1x32x16xf32> to vector<32x16xf32>
    %4 = arith.addf %1, %3 : vector<32x16xf32>
    %c0_4 = arith.constant 0 : index
    %c0_5 = arith.constant 0 : index
    %5 = vector.load %arg3[%c0_4, %c0_5] : memref<16x8xf32, #tpu.memory_space<vmem>>, vector<16x8xf32>
    %cst = arith.constant dense<0.000000e+00> : vector<32x8xf32>
    %6 = tpu.matmul %4, %5, %cst {dimension_numbers = #tpu.dot_dimension_numbers<[1], [0], [0], [1], [0, 0, 1, 1], [], []>} : vector<32x16xf32>, vector<16x8xf32>, vector<32x8xf32> -> vector<32x8xf32>
    %cst_6 = arith.constant 2.500000e-01 : f32
    %7 = vector.broadcast %cst_6 : f32 to vector<32x8xf32>
    %8 = arith.mulf %6, %7 : vector<32x8xf32>
    %c0_7 = arith.constant 0 : index
    %c0_8 = arith.constant 0 : index
    %c0_9 = arith.constant 0 : index
    %c0_10 = arith.constant 0 : index
    %9 = vector.load %arg4[%c0_7, %c0_8, %c0_9, %c0_10] : memref<1x2x32x8xf32, #tpu.memory_space<vmem>>, vector<1x1x32x8xf32>
    %10 = vector.shape_cast %9 : vector<1x1x32x8xf32> to vector<32x8xf32>
    %11 = vector.shape_cast %8 : vector<32x8xf32> to vector<1x1x32x8xf32>
    tpu.vector_store %arg4[%c0_7, %c0_8, %c0_9, %c0_10], %11 {strides = array<i32>} : memref<1x2x32x8xf32, #tpu.memory_space<vmem>>, vector<1x1x32x8xf32>,
    %cst_11 = arith.constant 0.000000e+00 : f32
    %12 = vector.broadcast %cst_11 : f32 to vector<1x32x8xf32>
    %c0_12 = arith.constant 0 : index
    %c1_13 = arith.constant 1 : index
    %c0_14 = arith.constant 0 : index
    %c0_15 = arith.constant 0 : index
    %13 = vector.load %arg4[%c0_12, %c1_13, %c0_14, %c0_15] : memref<1x2x32x8xf32, #tpu.memory_space<vmem>>, vector<1x1x32x8xf32>
    %14 = vector.shape_cast %13 : vector<1x1x32x8xf32> to vector<1x32x8xf32>
    %15 = vector.shape_cast %12 : vector<1x32x8xf32> to vector<1x1x32x8xf32>
    tpu.vector_store %arg4[%c0_12, %c1_13, %c0_14, %c0_15], %15 {strides = array<i32>} : memref<1x2x32x8xf32, #tpu.memory_space<vmem>>, vector<1x1x32x8xf32>,
    return
  }
  func.func @transform_0(%arg0: i32, %arg1: i32) -> (i32, i32, i32) {
    %c0_i32 = arith.constant 0 : i32
    %c0_i32_0 = arith.constant 0 : i32
    return %arg0, %arg1, %c0_i32 : i32, i32, i32
  }
  func.func @transform_1(%arg0: i32, %arg1: i32) -> (i32, i32) {
    %c0_i32 = arith.constant 0 : i32
    %c0_i32_0 = arith.constant 0 : i32
    %c0_i32_1 = arith.constant 0 : i32
    return %c0_i32, %c0_i32_0 : i32, i32
  }
  func.func @transform_2(%arg0: i32, %arg1: i32) -> (i32, i32, i32, i32) {
    %c0_i32 = arith.constant 0 : i32
    %c0_i32_0 = arith.constant 0 : i32
    %c0_i32_1 = arith.constant 0 : i32
    return %arg0, %c0_i32, %arg1, %c0_i32_0 : i32, i32, i32, i32
  }
}

</mosaic_0001>

<llo_original>
// kernel: downsample.1
$region0: #{downsample.1}
  #allocation0 [shape = 'u32[]', space=smem, size = 0x4, offset = 0x4, fixed_abs, tag = 'smem constant byte address 0x4 - core index']
  #allocation1 [shape = 'u32[72,128]{1,0:T(1,128)}', space=vmem, size = 0x9000, scoped, tag = 'internal scratch']
  %s0 = inlined_call_operand.hbm [shape: f32[2,64,16], index: 0, kind: input, shape index: {}]
  %s1 = inlined_call_operand.vmem [shape: f32[16,8], index: 1, kind: input, shape index: {}]
  %s2 = inlined_call_operand.hbm [shape: f32[2,2,32,8], index: 2, kind: output, shape index: {}]
  %s3 = sld [smem:[#allocation0]]
  $region45: #{downsample.1} parent=0
    _
  %s5 = ssub.s32 1, %s3
  %s6 = scalar_select 0, %s5, %s3
  $region1: #{downsample.1} parent=0
    #allocation2 [shape = 'u8[65536]{0}', space=vmem, size = 0x10000, scoped, tag = 'input window, operand 0']
    #allocation3 [shape = 's32[2]{0}', space=sflag, size = 0x8, scoped, tag = 'scoped memory for downsample.1']
    #allocation4 [shape = 's32[2]{0}', space=sflag, size = 0x8, scoped, tag = 'scoped memory for downsample.1']
    #allocation5 [shape = 'u8[65536]{0}', space=vmem, size = 0x10000, scoped, tag = 'output window, operand 0']
    %7 = vsyncpa [#allocation3], 0
    %s8 = scalar_lea.sflag [#allocation3], 1
    %9 = vsyncpa %s8, 0
    %10 = vsyncpa [#allocation4], 0
    %s11 = scalar_lea.sflag [#allocation4], 1
    %12 = vsyncpa %s11, 0
    loop: start=0, step=1, limit=4
    $region2: #{downsample.1} parent=1 // loop_pre_header
      _
    $region3: #{downsample.1} parent=1 // loop_header
      %s14 = sphi 0, %s18
      %p15 = scmp.ge.s32.totalorder %s14, 4
      %s21 = sphi 0, %s33
      %s22 = sphi 0, %s29
      %s23 = sphi 0, %s21
      %s24 = sphi 0, %s22
      %s25 = sphi 0, %s23
      %s26 = sphi 0, %s24
      %s38 = sphi 0, %s40
      %s41 = sphi 0, %s38
      %s42 = sphi 0, %s41
      %s58 = sphi 0, %s42
      %s62 = sphi 0, %s62
      %s64 = sphi 0, %s62
      %s65 = sphi 0, %s64
      %s79 = sphi 0, %s65
      %s87 = sphi 0, %s89
      %s90 = sphi 0, %s87
      %s91 = sphi 0, %s90
      %s107 = sphi 0, %s91
    $region4: #{downsample.1} parent=1 // loop_header_branch
      %17 = sbr.rel (%p15) target = $region8
    $region5: #{downsample.1} parent=1 // loop_body
      %s19 = ssub.s32 %s14, 1
      %s20 = ssub.s32 %s14, 2
      %s27 = sadd.s32 1, %s22
      %p28 = scmp.ge.s32.totalorder %s27, 1
      %s29 = scalar_select %p28, 0, %s27
      %s30 = sadd.s32 1, %s21
      %s31 = scalar_select %p28, %s30, %s21
      %p32 = scmp.ge.s32.totalorder %s31, 2
      %s33 = scalar_select %p32, 0, %s31
      %s34 = ssub.s32 %s21, %s33
      %s35 = ssub.s32 %s22, %s29
      %s36 = sor.u32 %s34, %s35
      %p37 = scmp.eq.s32.totalorder %s36, 0
      %s39 = sadd.s32 %s38, 1
      %s40 = scalar_select %p37, %s38, %s39
      %p43 = pneg %p37
      %p44 = scmp.eq.s32.totalorder %s14, 1
      %p45 = por %p43, %p44
      %p46 = scmp.ne.s32.totalorder %s38, %s41
      %p47 = scmp.eq.s32.totalorder %s14, 0
      %p48 = por %p46, %p47
      %p49 = scmp.ne.s32.totalorder %s38, %s41
      %p50 = scmp.eq.s32.totalorder %s19, 1
      %p51 = por %p49, %p50
      %p52 = scmp.ne.s32.totalorder %s41, %s42
      %p53 = scmp.eq.s32.totalorder %s19, 0
      %p54 = por %p52, %p53
      %p55 = scmp.ne.s32.totalorder %s41, %s42
      %p56 = scmp.eq.s32.totalorder %s20, 1
      %p57 = por %p55, %p56
      %p59 = scmp.ne.s32.totalorder %s42, %s58
      %p60 = scmp.eq.s32.totalorder %s20, 0
      %p61 = por %p59, %p60
      %s63 = sadd.s32 %s62, 1
      %p66 = scmp.eq.s32.totalorder %s14, 1
      %p67 = scmp.ne.s32.totalorder %s62, %s64
      %p68 = scmp.eq.s32.totalorder %s14, 0
      %p69 = por %p67, %p68
      %p70 = scmp.ne.s32.totalorder %s62, %s64
      %p71 = scmp.eq.s32.totalorder %s19, 1
      %p72 = por %p70, %p71
      %p73 = scmp.ne.s32.totalorder %s64, %s65
      %p74 = scmp.eq.s32.totalorder %s19, 0
      %p75 = por %p73, %p74
      %p76 = scmp.ne.s32.totalorder %s64, %s65
      %p77 = scmp.eq.s32.totalorder %s20, 1
      %p78 = por %p76, %p77
      %p80 = scmp.ne.s32.totalorder %s65, %s79
      %p81 = scmp.eq.s32.totalorder %s20, 0
      %p82 = por %p80, %p81
      %s83 = ssub.s32 %s21, %s33
      %s84 = ssub.s32 %s22, %s29
      %s85 = sor.u32 %s83, %s84
      %p86 = scmp.eq.s32.totalorder %s85, 0
      %s88 = sadd.s32 %s87, 1
      %s89 = scalar_select %p86, %s87, %s88
      %p92 = pneg %p86
      %p93 = scmp.eq.s32.totalorder %s14, 1
      %p94 = por %p92, %p93
      %p95 = scmp.ne.s32.totalorder %s87, %s90
      %p96 = scmp.eq.s32.totalorder %s14, 0
      %p97 = por %p95, %p96
      %p98 = scmp.ne.s32.totalorder %s87, %s90
      %p99 = scmp.eq.s32.totalorder %s19, 1
      %p100 = por %p98, %p99
      %p101 = scmp.ne.s32.totalorder %s90, %s91
      %p102 = scmp.eq.s32.totalorder %s19, 0
      %p103 = por %p101, %p102
      %p104 = scmp.ne.s32.totalorder %s90, %s91
      %p105 = scmp.eq.s32.totalorder %s20, 1
      %p106 = por %p104, %p105
      %p108 = scmp.ne.s32.totalorder %s91, %s107
      %p109 = scmp.eq.s32.totalorder %s20, 0
      %p110 = por %p108, %p109
      %p111 = scmp.le.s32.totalorder 1, %s14
      %p112 = scmp.lt.s32.totalorder %s14, 3
      %p113 = pnand %p111, %p112
      %p114 = pneg %p113
      // Predicated region
      $region9: #{downsample.1} parent=5 // pred_check
        _
      $region10: #{downsample.1} parent=5 // pred_check_branch
        %116 = sbr.rel (%p113) target = $region12
      $region11: #{downsample.1} parent=5 // pred_region
        %s117 = ssub.s32 %s14, 1
        // Predicated region
        $region13: #{downsample.1} parent=11 // pred_check
          %p118 = pneg %p75
        $region14: #{downsample.1} parent=11 // pred_check_branch
          %120 = sbr.rel (%p118) target = $region16
        $region15: #{downsample.1} parent=11 // pred_region
          _
        $region16: #{downsample.1} parent=11 // pred_fallthru
          _
      $region12: #{downsample.1} parent=5 // pred_fallthru
        _
      %p121 = scmp.lt.s32.totalorder %s14, 2
      // Predicated region
      $region17: #{downsample.1} parent=5 // pred_check
        %p122 = pneg %p121
      $region18: #{downsample.1} parent=5 // pred_check_branch
        %124 = sbr.rel (%p122) target = $region20
      $region19: #{downsample.1} parent=5 // pred_region
        // Predicated region
        $region21: #{downsample.1} parent=19 // pred_check
          %p125 = pneg %p48
        $region22: #{downsample.1} parent=19 // pred_check_branch
          %127 = sbr.rel (%p125) target = $region24
        $region23: #{downsample.1} parent=19 // pred_region
          %s128 = sand.u32 %s38, 1
          %s129 = scalar_lea.sflag [#allocation3], %s128
          %s130 = sand.u32 %s38, 1
          %s131 = smul.addr %s130, 64
          %s132 = scalar_lea.vmem [#allocation2], %s131
          %s133 = smul.u32 8, %s22
          %135 = vsyncadd %s129, 0
          %s136 = smul.addr %s21, 8
          %s137 = sadd.s32 %s133, %s136
          %s138 = smul.addr %s137, 8
          %s139 = scalar_lea.hbm %s0, %s138
          %s140 = sshll.u32 %s139, 4
          %s141 = int_to_ptr.hbm [resolvable:$true] %s140
          %s142 = sshll.u32 %s132, 4
          %s143 = int_to_ptr.vmem [resolvable:$true] %s142
          %148 = dma.hbm_to_vmem [thread:$0]  %s141, 1024, %s143, %s129, 128, 128, 8
        $region24: #{downsample.1} parent=19 // pred_fallthru
          _
      $region20: #{downsample.1} parent=5 // pred_fallthru
        _
      %p149 = scmp.le.s32.totalorder 1, %s14
      %p150 = scmp.lt.s32.totalorder %s14, 3
      %p151 = pnand %p149, %p150
      %p152 = pneg %p151
      // Predicated region
      $region25: #{downsample.1} parent=5 // pred_check
        _
      $region26: #{downsample.1} parent=5 // pred_check_branch
        %154 = sbr.rel (%p151) target = $region28
      $region27: #{downsample.1} parent=5 // pred_region
        %s155 = ssub.s32 %s14, 1
        %s156 = sand.u32 %s41, 1
        %s157 = scalar_lea.sflag [#allocation3], %s156
        %s158 = sand.u32 %s41, 1
        %s159 = smul.addr %s158, 64
        %s160 = scalar_lea.vmem [#allocation2], %s159
        // Predicated region
        $region29: #{downsample.1} parent=27 // pred_check
          %p161 = pneg %p54
        $region30: #{downsample.1} parent=27 // pred_check_branch
          %163 = sbr.rel (%p161) target = $region32
        $region31: #{downsample.1} parent=27 // pred_region
          %165 = dma.done %s157, 1024
        $region32: #{downsample.1} parent=27 // pred_fallthru
          _
        %s166 = sand.u32 %s41, 1
        %s167 = scalar_lea.sflag [#allocation3], %s166
        %s168 = sand.u32 %s41, 1
        %s169 = smul.addr %s168, 64
        %s170 = scalar_lea.vmem [#allocation2], %s169
        %p171 = pneg %p54
        %p172 = pneg %p51
        %p173 = pneg %p75
        %p174 = pneg %p72
        %p175 = pneg %p103
        %p176 = pneg %p100
        %s177 = sand.u32 %s90, 1
        %s178 = scalar_lea.sflag [#allocation4], %s177
        %s179 = sand.u32 %s90, 1
        %s180 = smul.addr %s179, 64
        %s181 = scalar_lea.vmem [#allocation5], %s180
        %s182 = smul.u32 8, %s24
        %s183 = smul.u32 4, %s24
        %v184 = vld [vmem:[%s160] ss:$2 sm:$0xff]
        %s185 = scalar_lea.vmem %s160, 16 [#allocation2]
        %v186 = vld [vmem:[%s185] ss:$2 sm:$0xff]
        %s187 = scalar_lea.vmem %s160, 32 [#allocation2]
        %v188 = vld [vmem:[%s187] ss:$2 sm:$0xff]
        %s189 = scalar_lea.vmem %s160, 48 [#allocation2]
        %v190 = vld [vmem:[%s189] ss:$2 sm:$0xff]
        %s191 = scalar_lea.vmem %s160, 1 [#allocation2]
        %v192 = vld [vmem:[%s191] ss:$2 sm:$0xff]
        %s193 = scalar_lea.vmem %s160, 17 [#allocation2]
        %v194 = vld [vmem:[%s193] ss:$2 sm:$0xff]
        %s195 = scalar_lea.vmem %s160, 33 [#allocation2]
        %v196 = vld [vmem:[%s195] ss:$2 sm:$0xff]
        %s197 = scalar_lea.vmem %s160, 49 [#allocation2]
        %v198 = vld [vmem:[%s197] ss:$2 sm:$0xff]
        %v199 = vadd.f32 %v184, %v192
        %v200 = vadd.f32 %v186, %v194
        %v201 = vadd.f32 %v188, %v196
        %v202 = vadd.f32 %v190, %v198
        %v203 = vld [vmem:[%s1] sm:$0xff]
        %v204 = vld [vmem:[%s1 + $0x8] sm:$0xff]
        %vm205 = vcmask 130048
        %v207 = vsel %vm205, %v199, 0
        %v210 = vsel %vm205, %v200, 0
        %v213 = vsel %vm205, %v201, 0
        %v216 = vsel %vm205, %v202, 0
        %218 = vmatpush.msra.mxu0 0.0
        %219 = vmatpush.msra.mxu0 0.0
        %220 = vmatpush.msra.mxu0 0.0
        %221 = vmatpush.msra.mxu0 0.0
        %222 = vmatpush.msra.mxu0 0.0
        %223 = vmatpush.msra.mxu0 0.0
        %224 = vmatpush.msra.mxu0 0.0
        %225 = vmatpush.msra.mxu0 0.0
        %226 = vmatpush.msra.mxu0 0.0
        %227 = vmatpush.msra.mxu0 0.0
        %228 = vmatpush.msra.mxu0 0.0
        %229 = vmatpush.msra.mxu0 0.0
        %230 = vmatpush.msra.mxu0 0.0
        %231 = vmatpush.msra.mxu0 0.0
        %232 = vmatpush.msra.mxu0 %v204
        %233 = vmatpush.msra.mxu0 %v203
        %234 = vmatmul.f32.gmra.mxu0 %v207
        %v235 = vpop.f32.mrf.mxu0
        %v236 = vadd.f32 0.0, %v235
        %237 = vmatmul.f32.gmra.mxu0 %v210
        %v238 = vpop.f32.mrf.mxu0
        %v239 = vadd.f32 0.0, %v238
        %240 = vmatmul.f32.gmra.mxu0 %v213
        %v241 = vpop.f32.mrf.mxu0
        %v242 = vadd.f32 0.0, %v241
        %243 = vmatmul.f32.gmra.mxu0 %v216
        %v244 = vpop.f32.mrf.mxu0
        %v245 = vadd.f32 0.0, %v244
        %246 = vdwg.mxu0
        %v247 = vmul.f32 %v236, 0.25
        %v248 = vmul.f32 %v239, 0.25
        %v249 = vmul.f32 %v242, 0.25
        %v250 = vmul.f32 %v245, 0.25
        %vm251 = vcmask 64512
        %252 = vst.msk [vmem:[%s181] sm:$0xff] %vm251, %v247
        %253 = vst.msk [vmem:[%s181 + $0x8] sm:$0xff] %vm251, %v248
        %254 = vst.msk [vmem:[%s181 + $0x10] sm:$0xff] %vm251, %v249
        %255 = vst.msk [vmem:[%s181 + $0x18] sm:$0xff] %vm251, %v250
        %s256 = scalar_lea.vmem %s181, 32 [#allocation5]
        %257 = vst.msk [vmem:[%s256] sm:$0xff] %vm251, 0.0
        %258 = vst.msk [vmem:[%s256 + $0x8] sm:$0xff] %vm251, 0.0
        %259 = vst.msk [vmem:[%s256 + $0x10] sm:$0xff] %vm251, 0.0
        %260 = vst.msk [vmem:[%s256 + $0x18] sm:$0xff] %vm251, 0.0
        %s261 = sand.u32 %s90, 1
        %s262 = scalar_lea.sflag [#allocation4], %s261
        %s263 = sand.u32 %s90, 1
        %s264 = smul.addr %s263, 64
        %s265 = scalar_lea.vmem [#allocation5], %s264
        // Predicated region
        $region33: #{downsample.1} parent=27 // pred_check
          %p266 = pneg %p100
        $region34: #{downsample.1} parent=27 // pred_check_branch
          %268 = sbr.rel (%p266) target = $region36
        $region35: #{downsample.1} parent=27 // pred_region
          %s269 = smul.u32 4, %s24
          %271 = vsyncadd %s262, 0
          %s272 = smul.addr %s23, 8
          %s273 = sadd.s32 %s269, %s272
          %s274 = smul.addr %s273, 8
          %s275 = scalar_lea.hbm %s2, %s274
          %s276 = sshll.u32 %s265, 4
          %s277 = int_to_ptr.vmem [resolvable:$true] %s276
          %s278 = sshll.u32 %s275, 4
          %s279 = int_to_ptr.hbm [resolvable:$true] %s278
          %284 = dma.vmem_to_hbm [thread:$0]  %s277, 1024, %s279, %s262, 128, 128, 8
        $region36: #{downsample.1} parent=27 // pred_fallthru
          _
      $region28: #{downsample.1} parent=5 // pred_fallthru
        _
      %p285 = scmp.le.s32.totalorder 2, %s14
      // Predicated region
      $region37: #{downsample.1} parent=5 // pred_check
        %p286 = pneg %p285
      $region38: #{downsample.1} parent=5 // pred_check_branch
        %288 = sbr.rel (%p286) target = $region40
      $region39: #{downsample.1} parent=5 // pred_region
        %s289 = ssub.s32 %s14, 2
        // Predicated region
        $region41: #{downsample.1} parent=39 // pred_check
          %p290 = pneg %p106
        $region42: #{downsample.1} parent=39 // pred_check_branch
          %292 = sbr.rel (%p290) target = $region44
        $region43: #{downsample.1} parent=39 // pred_region
          %s293 = sand.u32 %s91, 1
          %s294 = scalar_lea.sflag [#allocation4], %s293
          %s295 = sand.u32 %s91, 1
          %s296 = smul.addr %s295, 64
          %s297 = scalar_lea.vmem [#allocation5], %s296
          %299 = dma.done %s294, 1024
        $region44: #{downsample.1} parent=39 // pred_fallthru
          _
      $region40: #{downsample.1} parent=5 // pred_fallthru
        _
    $region6: #{downsample.1} parent=1 // loop_footer
      %s18 = sadd.s32 1, %s14
    $region7: #{downsample.1} parent=1 // loop_footer_branch
      %13 = sbr.rel target = $region3
    $region8: #{downsample.1} parent=1 // loop_exit
      _
    %300 = vsyncpa [#allocation3], 1
    %s301 = scalar_lea.sflag [#allocation3], 1
    %302 = vsyncpa %s301, 1
    %303 = vsyncpa [#allocation4], 1
    %s304 = scalar_lea.sflag [#allocation4], 1
    %305 = vsyncpa %s304, 1

</llo_original>
